<compile_context>
chip_gen: v7x
topology: tpu7x:2x2x1
jax: 0.10.0
libtpu: 0.0.40
codegen_flags: <defaults>
</compile_context>

<pallas_src>
import jax
import jax.numpy as jnp
from jax import lax
from jax.experimental import pallas as pl
from jax.experimental.pallas import tpu as pltpu


def _round_up(n, m):
    return ((n + m - 1) // m) * m


def rbm_forward_kernel(x_ref, w_ref, hb_ref, vb_ref, uh_ref, uv_ref, out_ref):
    x = x_ref[...]                      # (TB, Vp) bf16
    w = w_ref[...]                      # (Vp, Hp) bf16 (resident across grid)

    # ---- v2h: hidden logits -> Bernoulli sample -----------------------------
    h_logits = jnp.dot(x, w, preferred_element_type=jnp.float32) + hb_ref[...]
    # u < sigmoid(z)  <=>  u * (1 + exp(-z)) < 1   (divide-free)
    h = (uh_ref[...] * (1.0 + jnp.exp(-h_logits)) < 1.0)

    # ---- h2v: visible logits -> Bernoulli sample ----------------------------
    # Contract the hidden axis of h (TB, Hp) with the hidden axis of W (Vp, Hp)
    # directly on the MXU — no transposed weight copy.
    v_logits = lax.dot_general(
        h.astype(jnp.bfloat16), w,
        dimension_numbers=(((1,), (1,)), ((), ())),
        preferred_element_type=jnp.float32) + vb_ref[...]
    out_ref[...] = (uv_ref[...] * (1.0 + jnp.exp(-v_logits)) < 1.0).astype(jnp.float32)


def rbm_forward(x, W, h_bias, v_bias, seed=0, block_batch=512):
    """x: (batch, visible_dim); W: (visible_dim, hidden_dim);
    h_bias: (hidden_dim, 1); v_bias: (visible_dim, 1). Returns (batch, visible_dim) f32."""
    batch, visible_dim = x.shape
    hidden_dim = W.shape[1]

    # TPU-friendly padded shapes: lanes multiple of 128, batch tile multiple of 16.
    Vp = _round_up(visible_dim, 128)
    Hp = _round_up(hidden_dim, 128)
    TB = min(block_batch, _round_up(batch, 16))
    Bp = _round_up(batch, TB)

    # Zero padding is semantics-preserving: padded W rows/cols and padded
    # biases are zero, so padded hidden/visible units never affect real ones,
    # and padded batch rows / visible columns are sliced off below.
    xp = jnp.zeros((Bp, Vp), jnp.bfloat16).at[:batch, :visible_dim].set(
        x.astype(jnp.bfloat16))
    Wp = jnp.zeros((Vp, Hp), jnp.bfloat16).at[:visible_dim, :hidden_dim].set(
        W.astype(jnp.bfloat16))
    hb = jnp.zeros((1, Hp), jnp.float32).at[:, :hidden_dim].set(
        h_bias.reshape(1, hidden_dim).astype(jnp.float32))
    vb = jnp.zeros((1, Vp), jnp.float32).at[:, :visible_dim].set(
        v_bias.reshape(1, visible_dim).astype(jnp.float32))

    # Uniform noise for both sampling stages (replaces torch's stateful RNG).
    k_h, k_v = jax.random.split(jax.random.PRNGKey(seed))
    u_h = jax.random.uniform(k_h, (Bp, Hp), dtype=jnp.float32)
    u_v = jax.random.uniform(k_v, (Bp, Vp), dtype=jnp.float32)

    grid = (Bp // TB,)

    out = pl.pallas_call(
        rbm_forward_kernel,
        out_shape=jax.ShapeDtypeStruct((Bp, Vp), jnp.float32),
        grid=grid,
        in_specs=[
            pl.BlockSpec((TB, Vp), lambda i: (i, 0)),   # x tile (streamed)
            pl.BlockSpec((Vp, Hp), lambda i: (0, 0)),   # W (VMEM-resident)
            pl.BlockSpec((1, Hp), lambda i: (0, 0)),    # h_bias (1, Hp)
            pl.BlockSpec((1, Vp), lambda i: (0, 0)),    # v_bias (1, Vp)
            pl.BlockSpec((TB, Hp), lambda i: (i, 0)),   # uniform noise for h
            pl.BlockSpec((TB, Vp), lambda i: (i, 0)),   # uniform noise for v
        ],
        out_specs=pl.BlockSpec((TB, Vp), lambda i: (i, 0)),
        compiler_params=pltpu.CompilerParams(
            dimension_semantics=("parallel",)),
    )(xp, Wp, hb, vb, u_h, u_v)

    return out[:batch, :visible_dim]


if __name__ == "__main__":
    # Small shapes consistent with forward(x: (batch, visible_dim))
    batch = 8
    visible_dim = 16
    hidden_dim = 32

    key = jax.random.PRNGKey(0)
    kx, kw = jax.random.split(key)

    # Deterministic parameter init mirroring __init__:
    #   W ~ randn(visible_dim, hidden_dim); biases = zeros
    W = jax.random.normal(kw, (visible_dim, hidden_dim), dtype=jnp.float32)
    v_bias = jnp.zeros((visible_dim, 1), dtype=jnp.float32)
    h_bias = jnp.zeros((hidden_dim, 1), dtype=jnp.float32)

    # Binary visible input (typical RBM input)
    x = jax.random.bernoulli(kx, p=0.5, shape=(batch, visible_dim)).astype(jnp.float32)

    out = rbm_forward(x, W, h_bias, v_bias, seed=0)
    out = jax.block_until_ready(out)

    assert out.shape == (batch, visible_dim)
    assert out.dtype == jnp.float32
    # Bernoulli samples must be in {0, 1}
    assert bool(jnp.all((out == 0.0) | (out == 1.0)))

    print("KERNEL_OK")
</pallas_src>

<mosaic_0001>
module attributes {stable_mosaic.version = 11 : i64} {
  func.func @rbm_forward_kernel(%arg0: i32, %arg1: memref<16x128xbf16, #tpu.memory_space<vmem>>, %arg2: memref<128x128xbf16, #tpu.memory_space<vmem>>, %arg3: memref<1x128xf32, #tpu.memory_space<vmem>>, %arg4: memref<1x128xf32, #tpu.memory_space<vmem>>, %arg5: memref<16x128xf32, #tpu.memory_space<vmem>>, %arg6: memref<16x128xf32, #tpu.memory_space<vmem>>, %arg7: memref<16x128xf32, #tpu.memory_space<vmem>>) attributes {dimension_semantics = [#tpu.dimension_semantics<parallel>], iteration_bounds = array<i64: 1>, scalar_prefetch = 0 : i64, scratch_operands = 0 : i64, tpu.core_type = #tpu.core_type<tc>, window_params = [{transform_indices = @transform_0, window_bounds = array<i64: 16, 128>}, {pipeline_mode = #tpu.pipeline_mode<synchronous>, transform_indices = @transform_1, window_bounds = array<i64: 128, 128>}, {pipeline_mode = #tpu.pipeline_mode<synchronous>, transform_indices = @transform_2, window_bounds = array<i64: 1, 128>}, {pipeline_mode = #tpu.pipeline_mode<synchronous>, transform_indices = @transform_3, window_bounds = array<i64: 1, 128>}, {transform_indices = @transform_4, window_bounds = array<i64: 16, 128>}, {transform_indices = @transform_5, window_bounds = array<i64: 16, 128>}, {transform_indices = @transform_6, window_bounds = array<i64: 16, 128>}]} {
    %c0 = arith.constant 0 : index
    %c0_0 = arith.constant 0 : index
    %0 = vector.load %arg1[%c0, %c0_0] : memref<16x128xbf16, #tpu.memory_space<vmem>>, vector<16x128xbf16>
    %c0_1 = arith.constant 0 : index
    %c0_2 = arith.constant 0 : index
    %1 = vector.load %arg2[%c0_1, %c0_2] : memref<128x128xbf16, #tpu.memory_space<vmem>>, vector<128x128xbf16>
    %cst = arith.constant dense<0.000000e+00> : vector<16x128xf32>
    %2 = tpu.matmul %0, %1, %cst {dimension_numbers = #tpu.dot_dimension_numbers<[1], [0], [0], [1], [0, 0, 1, 1], [], []>} : vector<16x128xbf16>, vector<128x128xbf16>, vector<16x128xf32> -> vector<16x128xf32>
    %c0_3 = arith.constant 0 : index
    %c0_4 = arith.constant 0 : index
    %3 = vector.load %arg3[%c0_3, %c0_4] : memref<1x128xf32, #tpu.memory_space<vmem>>, vector<1x128xf32>
    %4 = vector.broadcast %3 : vector<1x128xf32> to vector<16x128xf32>
    %5 = arith.addf %2, %4 : vector<16x128xf32>
    %c0_5 = arith.constant 0 : index
    %c0_6 = arith.constant 0 : index
    %6 = vector.load %arg5[%c0_5, %c0_6] : memref<16x128xf32, #tpu.memory_space<vmem>>, vector<16x128xf32>
    %cst_7 = arith.constant 0.000000e+00 : f32
    %7 = vector.broadcast %cst_7 : f32 to vector<16x128xf32>
    %8 = arith.subf %7, %5 : vector<16x128xf32>
    %9 = math.exp %8 : vector<16x128xf32>
    %cst_8 = arith.constant 1.000000e+00 : f32
    %10 = vector.broadcast %cst_8 : f32 to vector<16x128xf32>
    %11 = arith.addf %10, %9 : vector<16x128xf32>
    %12 = arith.mulf %6, %11 : vector<16x128xf32>
    %cst_9 = arith.constant 1.000000e+00 : f32
    %13 = vector.broadcast %cst_9 : f32 to vector<16x128xf32>
    %14 = arith.cmpf olt, %12, %13 : vector<16x128xf32>
    %15 = arith.extui %14 : vector<16x128xi1> to vector<16x128xi32>
    %16 = arith.sitofp %15 : vector<16x128xi32> to vector<16x128xf32>
    %17 = arith.truncf %16 : vector<16x128xf32> to vector<16x128xbf16>
    %cst_10 = arith.constant dense<0.000000e+00> : vector<16x128xf32>
    %18 = tpu.matmul %17, %1, %cst_10 {dimension_numbers = #tpu.dot_dimension_numbers<[1], [1], [0], [0], [0, 0, 1, 0], [], []>} : vector<16x128xbf16>, vector<128x128xbf16>, vector<16x128xf32> -> vector<16x128xf32>
    %c0_11 = arith.constant 0 : index
    %c0_12 = arith.constant 0 : index
    %19 = vector.load %arg4[%c0_11, %c0_12] : memref<1x128xf32, #tpu.memory_space<vmem>>, vector<1x128xf32>
    %20 = vector.broadcast %19 : vector<1x128xf32> to vector<16x128xf32>
    %21 = arith.addf %18, %20 : vector<16x128xf32>
    %c0_13 = arith.constant 0 : index
    %c0_14 = arith.constant 0 : index
    %22 = vector.load %arg6[%c0_13, %c0_14] : memref<16x128xf32, #tpu.memory_space<vmem>>, vector<16x128xf32>
    %cst_15 = arith.constant 0.000000e+00 : f32
    %23 = vector.broadcast %cst_15 : f32 to vector<16x128xf32>
    %24 = arith.subf %23, %21 : vector<16x128xf32>
    %25 = math.exp %24 : vector<16x128xf32>
    %cst_16 = arith.constant 1.000000e+00 : f32
    %26 = vector.broadcast %cst_16 : f32 to vector<16x128xf32>
    %27 = arith.addf %26, %25 : vector<16x128xf32>
    %28 = arith.mulf %22, %27 : vector<16x128xf32>
    %cst_17 = arith.constant 1.000000e+00 : f32
    %29 = vector.broadcast %cst_17 : f32 to vector<16x128xf32>
    %30 = arith.cmpf olt, %28, %29 : vector<16x128xf32>
    %31 = arith.extui %30 : vector<16x128xi1> to vector<16x128xi32>
    %32 = arith.sitofp %31 : vector<16x128xi32> to vector<16x128xf32>
    %c0_18 = arith.constant 0 : index
    %c0_19 = arith.constant 0 : index
    %33 = vector.load %arg7[%c0_18, %c0_19] : memref<16x128xf32, #tpu.memory_space<vmem>>, vector<16x128xf32>
    tpu.vector_store %arg7[%c0_18, %c0_19], %32 {strides = array<i32>} : memref<16x128xf32, #tpu.memory_space<vmem>>, vector<16x128xf32>,
    return
  }
  func.func @transform_0(%arg0: i32) -> (i32, i32) {
    %c0_i32 = arith.constant 0 : i32
    %c0_i32_0 = arith.constant 0 : i32
    return %arg0, %c0_i32 : i32, i32
  }
  func.func @transform_1(%arg0: i32) -> (i32, i32) {
    %c0_i32 = arith.constant 0 : i32
    %c0_i32_0 = arith.constant 0 : i32
    %c0_i32_1 = arith.constant 0 : i32
    return %c0_i32, %c0_i32_0 : i32, i32
  }
  func.func @transform_2(%arg0: i32) -> (i32, i32) {
    %c0_i32 = arith.constant 0 : i32
    %c0_i32_0 = arith.constant 0 : i32
    %c0_i32_1 = arith.constant 0 : i32
    return %c0_i32, %c0_i32_0 : i32, i32
  }
  func.func @transform_3(%arg0: i32) -> (i32, i32) {
    %c0_i32 = arith.constant 0 : i32
    %c0_i32_0 = arith.constant 0 : i32
    %c0_i32_1 = arith.constant 0 : i32
    return %c0_i32, %c0_i32_0 : i32, i32
  }
  func.func @transform_4(%arg0: i32) -> (i32, i32) {
    %c0_i32 = arith.constant 0 : i32
    %c0_i32_0 = arith.constant 0 : i32
    return %arg0, %c0_i32 : i32, i32
  }
  func.func @transform_5(%arg0: i32) -> (i32, i32) {
    %c0_i32 = arith.constant 0 : i32
    %c0_i32_0 = arith.constant 0 : i32
    return %arg0, %c0_i32 : i32, i32
  }
  func.func @transform_6(%arg0: i32) -> (i32, i32) {
    %c0_i32 = arith.constant 0 : i32
    %c0_i32_0 = arith.constant 0 : i32
    return %arg0, %c0_i32 : i32, i32
  }
}

</mosaic_0001>

<llo_original>
// kernel: tpu_custom_call.1
$region0: #{tpu_custom_call.1}
  #allocation0 [shape = 'u32[]', space=smem, size = 0x4, offset = 0x4, fixed_abs, tag = 'smem constant byte address 0x4 - core index']
  #allocation1 [shape = 'u32[144,128]{1,0:T(1,128)}', space=vmem, size = 0x12000, scoped, tag = 'internal scratch']
  %s0 = inlined_call_operand.hbm [shape: bf16[16,128], index: 0, kind: input, shape index: {}]
  %s1 = inlined_call_operand.hbm [shape: bf16[128,128], index: 1, kind: input, shape index: {}]
  %s2 = inlined_call_operand.vmem [shape: f32[1,128], index: 2, kind: input, shape index: {}]
  %s3 = inlined_call_operand.vmem [shape: f32[1,128], index: 3, kind: input, shape index: {}]
  %s4 = inlined_call_operand.hbm [shape: f32[16,128], index: 4, kind: input, shape index: {}]
  %s5 = inlined_call_operand.vmem [shape: f32[16,128], index: 5, kind: input, shape index: {}]
  %s6 = inlined_call_operand.hbm [shape: f32[16,128], index: 6, kind: output, shape index: {}]
  %s7 = sld [smem:[#allocation0]]
  $region46: #{tpu_custom_call.1} parent=0
    _
  %s9 = ssub.s32 1, %s7
  %s10 = scalar_select 0, %s9, %s7
  $region1: #{tpu_custom_call.1} parent=0
    #allocation2 [shape = 'u8[4096]{0}', space=vmem, size = 0x1000, scoped, tag = 'input window, operand 0, single buffered']
    #allocation3 [shape = 's32[1]{0}', space=sflag, size = 0x4, scoped, tag = 'scoped memory for tpu_custom_call.1']
    #allocation4 [shape = 's32[1]{0}', space=sflag, size = 0x4, scoped, tag = 'scoped memory for tpu_custom_call.1']
    #allocation5 [shape = 'u8[32768]{0}', space=vmem, size = 0x8000, scoped, tag = 'input window, operand 1, single buffered']
    #allocation6 [shape = 's32[1]{0}', space=sflag, size = 0x4, scoped, tag = 'scoped memory for tpu_custom_call.1']
    #allocation7 [shape = 'u8[8192]{0}', space=vmem, size = 0x2000, scoped, tag = 'input window, operand 4, single buffered']
    #allocation8 [shape = 'u8[8192]{0}', space=vmem, size = 0x2000, scoped, tag = 'output window, operand 0, single buffered']
    %11 = vsyncpa [#allocation3], 0
    %12 = vsyncpa [#allocation6], 0
    %13 = vsyncpa [#allocation4], 0
    // Predicated region
    $region2: #{tpu_custom_call.1} parent=1 // pred_check
      _
    $region3: #{tpu_custom_call.1} parent=1 // pred_check_branch
      %15 = sbr.rel (0) target = $region5
    $region4: #{tpu_custom_call.1} parent=1 // pred_region
      %s17 = ssub.s32 128, 128
      %18 = vsyncadd [#allocation3], %s17
      %s19 = sshll.u32 [#allocation2], 4
      %s20 = int_to_ptr.vmem [resolvable:$true] %s19
      %25 = dma.hbm_to_vmem [thread:$0]  %s0, 128, %s20, [#allocation3], 64, 64, 4
    $region5: #{tpu_custom_call.1} parent=1 // pred_fallthru
      _
    // Predicated region
    $region6: #{tpu_custom_call.1} parent=1 // pred_check
      _
    $region7: #{tpu_custom_call.1} parent=1 // pred_check_branch
      %27 = sbr.rel (0) target = $region9
    $region8: #{tpu_custom_call.1} parent=1 // pred_region
      %s29 = ssub.s32 1024, 1024
      %30 = vsyncadd [#allocation6], %s29
      %s31 = sshll.u32 [#allocation5], 4
      %s32 = int_to_ptr.vmem [resolvable:$true] %s31
      %37 = dma.hbm_to_vmem [thread:$0]  %s1, 1024, %s32, [#allocation6], 64, 64, 4
    $region9: #{tpu_custom_call.1} parent=1 // pred_fallthru
      _
    // Predicated region
    $region10: #{tpu_custom_call.1} parent=1 // pred_check
      _
    $region11: #{tpu_custom_call.1} parent=1 // pred_check_branch
      %39 = sbr.rel (0) target = $region13
    $region12: #{tpu_custom_call.1} parent=1 // pred_region
      _
    $region13: #{tpu_custom_call.1} parent=1 // pred_fallthru
      _
    // Predicated region
    $region14: #{tpu_custom_call.1} parent=1 // pred_check
      _
    $region15: #{tpu_custom_call.1} parent=1 // pred_check_branch
      %41 = sbr.rel (0) target = $region17
    $region16: #{tpu_custom_call.1} parent=1 // pred_region
      _
    $region17: #{tpu_custom_call.1} parent=1 // pred_fallthru
      _
    // Predicated region
    $region18: #{tpu_custom_call.1} parent=1 // pred_check
      _
    $region19: #{tpu_custom_call.1} parent=1 // pred_check_branch
      %43 = sbr.rel (0) target = $region21
    $region20: #{tpu_custom_call.1} parent=1 // pred_region
      %s45 = ssub.s32 256, 256
      %46 = vsyncadd [#allocation6], %s45
      %s47 = sshll.u32 [#allocation7], 4
      %s48 = int_to_ptr.vmem [resolvable:$true] %s47
      %53 = dma.hbm_to_vmem [thread:$0]  %s4, 256, %s48, [#allocation6], 128, 128, 8
    $region21: #{tpu_custom_call.1} parent=1 // pred_fallthru
      _
    // Predicated region
    $region22: #{tpu_custom_call.1} parent=1 // pred_check
      _
    $region23: #{tpu_custom_call.1} parent=1 // pred_check_branch
      %55 = sbr.rel (0) target = $region25
    $region24: #{tpu_custom_call.1} parent=1 // pred_region
      _
    $region25: #{tpu_custom_call.1} parent=1 // pred_fallthru
      _
    // Predicated region
    $region26: #{tpu_custom_call.1} parent=1 // pred_check
      _
    $region27: #{tpu_custom_call.1} parent=1 // pred_check_branch
      %57 = sbr.rel (0) target = $region29
    $region28: #{tpu_custom_call.1} parent=1 // pred_region
      %58 = dma.done [#allocation3], 128
    $region29: #{tpu_custom_call.1} parent=1 // pred_fallthru
      _
    // Predicated region
    $region30: #{tpu_custom_call.1} parent=1 // pred_check
      _
    $region31: #{tpu_custom_call.1} parent=1 // pred_check_branch
      %60 = sbr.rel (0) target = $region33
    $region32: #{tpu_custom_call.1} parent=1 // pred_region
      %61 = dma.done [#allocation6], 1024
    $region33: #{tpu_custom_call.1} parent=1 // pred_fallthru
      _
    // Predicated region
    $region34: #{tpu_custom_call.1} parent=1 // pred_check
      _
    $region35: #{tpu_custom_call.1} parent=1 // pred_check_branch
      %63 = sbr.rel (0) target = $region37
    $region36: #{tpu_custom_call.1} parent=1 // pred_region
      %64 = dma.done [#allocation6], 256
    $region37: #{tpu_custom_call.1} parent=1 // pred_fallthru
      _
    %v66 = vld [vmem:[#allocation2] sm:$0xf]
    %v67 = vld [vmem:[#allocation2 + $0x4] sm:$0xf]
    %v68 = vld [vmem:[#allocation5] sm:$0xf]
    %v69 = vld [vmem:[#allocation5 + $0x4] sm:$0xf]
    %v70 = vld [vmem:[#allocation5 + $0x8] sm:$0xf]
    %v71 = vld [vmem:[#allocation5 + $0xc] sm:$0xf]
    %v72 = vld [vmem:[#allocation5 + $0x10] sm:$0xf]
    %v73 = vld [vmem:[#allocation5 + $0x14] sm:$0xf]
    %v74 = vld [vmem:[#allocation5 + $0x18] sm:$0xf]
    %v75 = vld [vmem:[#allocation5 + $0x1c] sm:$0xf]
    %v76 = vld [vmem:[#allocation5 + $0x20] sm:$0xf]
    %v77 = vld [vmem:[#allocation5 + $0x24] sm:$0xf]
    %v78 = vld [vmem:[#allocation5 + $0x28] sm:$0xf]
    %v79 = vld [vmem:[#allocation5 + $0x2c] sm:$0xf]
    %v80 = vld [vmem:[#allocation5 + $0x30] sm:$0xf]
    %v81 = vld [vmem:[#allocation5 + $0x34] sm:$0xf]
    %v82 = vld [vmem:[#allocation5 + $0x38] sm:$0xf]
    %v83 = vld [vmem:[#allocation5 + $0x3c] sm:$0xf]
    %v84 = vld [vmem:[%s2] sm:$0x1]
    %v86 = vlaneseq
    %v87 = vshrl.u32 %v86, 7
    %v88 = vsub.s32 0, %v87
    %v89 = vrot.slane %v84, %v88
    %v93 = vunpack.c.l.b16 %v66
    %v94 = vunpack.c.l.b16 %v67
    %v95 = vpack.c.b16 %v94, %v93
    %v113 = vunpack.c.l.b16 %v68
    %v114 = vunpack.c.l.b16 %v69
    %v115 = vunpack.c.l.b16 %v70
    %v116 = vunpack.c.l.b16 %v71
    %v117 = vunpack.c.l.b16 %v72
    %v118 = vunpack.c.l.b16 %v73
    %v119 = vunpack.c.l.b16 %v74
    %v120 = vunpack.c.l.b16 %v75
    %v121 = vunpack.c.l.b16 %v76
    %v122 = vunpack.c.l.b16 %v77
    %v123 = vunpack.c.l.b16 %v78
    %v124 = vunpack.c.l.b16 %v79
    %v125 = vunpack.c.l.b16 %v80
    %v126 = vunpack.c.l.b16 %v81
    %v127 = vunpack.c.l.b16 %v82
    %v128 = vunpack.c.l.b16 %v83
    %v129 = vpack.c.b16 %v114, %v113
    %v130 = vpack.c.b16 %v116, %v115
    %v131 = vpack.c.b16 %v118, %v117
    %v132 = vpack.c.b16 %v120, %v119
    %v133 = vpack.c.b16 %v122, %v121
    %v134 = vpack.c.b16 %v124, %v123
    %v135 = vpack.c.b16 %v126, %v125
    %v136 = vpack.c.b16 %v128, %v127
    %145 = vmatprep.subr.bf16.mxu0 0
    %146 = vmatpush1.bf16.msra.mxu0 %v129
    %147 = vmatprep.subr.bf16.mxu0 0
    %148 = vmatpush1.bf16.msra.mxu0 %v130
    %149 = vmatprep.subr.bf16.mxu0 0
    %150 = vmatpush1.bf16.msra.mxu0 %v131
    %151 = vmatprep.subr.bf16.mxu0 0
    %152 = vmatpush1.bf16.msra.mxu0 %v132
    %153 = vmatprep.subr.bf16.mxu0 0
    %154 = vmatpush1.bf16.msra.mxu0 %v133
    %155 = vmatprep.subr.bf16.mxu0 0
    %156 = vmatpush1.bf16.msra.mxu0 %v134
    %157 = vmatprep.subr.bf16.mxu0 0
    %158 = vmatpush1.bf16.msra.mxu0 %v135
    %159 = vmatprep.subr.bf16.mxu0 0
    %160 = vmatpush1.bf16.msra.mxu0 %v136
    %161 = vmatprep.subr.bf16.mxu0 0
    %162 = vmatpush1.bf16.msra.mxu0 0
    %163 = vmatprep.subr.bf16.mxu0 0
    %164 = vmatpush1.bf16.msra.mxu0 0
    %165 = vmatprep.subr.bf16.mxu0 0
    %166 = vmatpush1.bf16.msra.mxu0 0
    %167 = vmatprep.subr.bf16.mxu0 0
    %168 = vmatpush1.bf16.msra.mxu0 0
    %169 = vmatprep.subr.bf16.mxu0 0
    %170 = vmatpush1.bf16.msra.mxu0 0
    %171 = vmatprep.subr.bf16.mxu0 0
    %172 = vmatpush1.bf16.msra.mxu0 0
    %173 = vmatprep.subr.bf16.mxu0 0
    %174 = vmatpush1.bf16.msra.mxu0 0
    %175 = vmatprep.subr.bf16.mxu0 0
    %176 = vmatpush1.bf16.msra.mxu0 0
    %177 = vmatprep.mubr.bf16.mxu0 0
    %178 = vmatmul.mubr.bf16.gmra.mrb[0].mxu0 %v95
    %v179 = vpop.f32.mrb[0].mxu0
    %v180 = vadd.f32 %v89, %v179
    %v181 = vpop.f32.mrb[0].mxu0
    %v182 = vpop.f32.mrb[0].mxu0
    %v183 = vadd.f32 %v89, %v182
    %v184 = vpop.f32.mrb[0].mxu0
    %185 = vdwg.mxu0
    %v186 = vld [vmem:[#allocation7] sm:$0xff]
    %v187 = vld [vmem:[#allocation7 + $0x8] sm:$0xff]
    %v188 = vsub.f32 0.0, %v180
    %v189 = vsub.f32 0.0, %v183
    %v190 = vmul.f32 %v188, 1.442695
    %v191 = vpow.pop %v190
    %v192 = vmul.f32 %v189, 1.442695
    %v193 = vpow.pop %v192
    %v194 = vadd.f32 %v191, 1.0
    %v195 = vadd.f32 %v193, 1.0
    %v196 = vmul.f32 %v186, %v194
    %v197 = vmul.f32 %v187, %v195
    %vm198 = vcmp.lt.f32.partialorder %v196, 1.0
    %vm199 = vcmp.lt.f32.partialorder %v197, 1.0
    %v200 = vsel %vm198, 1, 0
    %v201 = vsel %vm199, 1, 0
    %v202 = vcvt.s32.f32 %v200
    %v203 = vcvt.s32.f32 %v201
    %v204 = vpack.c.bf16 %v203, %v202
    %v205 = vld [vmem:[%s3] sm:$0x1]
    %v207 = vlaneseq
    %v208 = vshrl.u32 %v207, 7
    %v209 = vsub.s32 0, %v208
    %v210 = vrot.slane %v205, %v209
    %212 = vmatprep.subr.bf16.mxu0 0
    %213 = vmatpush1.bf16.xpose.msra.mxu0 %v129
    %214 = vmatprep.subr.bf16.mxu0 0
    %215 = vmatpush1.bf16.xpose.msra.mxu0 %v130
    %216 = vmatprep.subr.bf16.mxu0 0
    %217 = vmatpush1.bf16.xpose.msra.mxu0 %v131
    %218 = vmatprep.subr.bf16.mxu0 0
    %219 = vmatpush1.bf16.xpose.msra.mxu0 %v132
    %220 = vmatprep.subr.bf16.mxu0 0
    %221 = vmatpush1.bf16.xpose.msra.mxu0 %v133
    %222 = vmatprep.subr.bf16.mxu0 0
    %223 = vmatpush1.bf16.xpose.msra.mxu0 %v134
    %224 = vmatprep.subr.bf16.mxu0 0
    %225 = vmatpush1.bf16.xpose.msra.mxu0 %v135
    %226 = vmatprep.subr.bf16.mxu0 0
    %227 = vmatpush1.bf16.xpose.msra.mxu0 %v136
    %228 = vmatprep.subr.bf16.mxu0 0
    %229 = vmatpush1.bf16.xpose.msra.mxu0 0
    %230 = vmatprep.subr.bf16.mxu0 0
    %231 = vmatpush1.bf16.xpose.msra.mxu0 0
    %232 = vmatprep.subr.bf16.mxu0 0
    %233 = vmatpush1.bf16.xpose.msra.mxu0 0
    %234 = vmatprep.subr.bf16.mxu0 0
    %235 = vmatpush1.bf16.xpose.msra.mxu0 0
    %236 = vmatprep.subr.bf16.mxu0 0
    %237 = vmatpush1.bf16.xpose.msra.mxu0 0
    %238 = vmatprep.subr.bf16.mxu0 0
    %239 = vmatpush1.bf16.xpose.msra.mxu0 0
    %240 = vmatprep.subr.bf16.mxu0 0
    %241 = vmatpush1.bf16.xpose.msra.mxu0 0
    %242 = vmatprep.subr.bf16.mxu0 0
    %243 = vmatpush1.bf16.xpose.msra.mxu0 0
    %244 = vmatprep.mubr.bf16.mxu0 0
    %245 = vmatmul.mubr.bf16.gmra.mrb[0].mxu0 %v204
    %v246 = vpop.f32.mrb[0].mxu0
    %v247 = vadd.f32 %v210, %v246
    %v248 = vpop.f32.mrb[0].mxu0
    %v249 = vpop.f32.mrb[0].mxu0
    %v250 = vadd.f32 %v210, %v249
    %v251 = vpop.f32.mrb[0].mxu0
    %252 = vdwg.mxu0
    %v253 = vld [vmem:[%s5] sm:$0xff]
    %v254 = vld [vmem:[%s5 + $0x8] sm:$0xff]
    %v255 = vsub.f32 0.0, %v247
    %v256 = vsub.f32 0.0, %v250
    %v257 = vmul.f32 %v255, 1.442695
    %v258 = vpow.pop %v257
    %v259 = vmul.f32 %v256, 1.442695
    %v260 = vpow.pop %v259
    %v261 = vadd.f32 %v258, 1.0
    %v262 = vadd.f32 %v260, 1.0
    %v263 = vmul.f32 %v253, %v261
    %v264 = vmul.f32 %v254, %v262
    %vm265 = vcmp.lt.f32.partialorder %v263, 1.0
    %vm266 = vcmp.lt.f32.partialorder %v264, 1.0
    %v267 = vsel %vm265, 1, 0
    %v268 = vsel %vm266, 1, 0
    %v269 = vcvt.s32.f32 %v267
    %v270 = vcvt.s32.f32 %v268
    %271 = vst [vmem:[#allocation8] sm:$0xff] %v269
    %272 = vst [vmem:[#allocation8 + $0x8] sm:$0xff] %v270
    // Predicated region
    $region38: #{tpu_custom_call.1} parent=1 // pred_check
      _
    $region39: #{tpu_custom_call.1} parent=1 // pred_check_branch
      %274 = sbr.rel (0) target = $region41
    $region40: #{tpu_custom_call.1} parent=1 // pred_region
      %s276 = ssub.s32 256, 256
      %277 = vsyncadd [#allocation4], %s276
      %s278 = sshll.u32 [#allocation8], 4
      %s279 = int_to_ptr.vmem [resolvable:$true] %s278
      %284 = dma.vmem_to_hbm [thread:$0]  %s279, 256, %s6, [#allocation4], 128, 128, 8
    $region41: #{tpu_custom_call.1} parent=1 // pred_fallthru
      _
    // Predicated region
    $region42: #{tpu_custom_call.1} parent=1 // pred_check
      _
    $region43: #{tpu_custom_call.1} parent=1 // pred_check_branch
      %286 = sbr.rel (0) target = $region45
    $region44: #{tpu_custom_call.1} parent=1 // pred_region
      %287 = dma.done [#allocation4], 256
    $region45: #{tpu_custom_call.1} parent=1 // pred_fallthru
      _
    %288 = vsyncpa [#allocation3], 1
    %289 = vsyncpa [#allocation6], 1
    %290 = vsyncpa [#allocation4], 1

</llo_original>
